<compile_context>
chip_gen: v6e
topology: v6e:2x2x1
jax: 0.10.0
libtpu: 0.0.40
codegen_flags: <defaults>
</compile_context>

<pallas_src>
import math

import jax
import jax.numpy as jnp
from jax import lax
from jax.experimental import pallas as pl
from jax.experimental.pallas import tpu as pltpu

# ---- module hyper-parameters (small, consistent with the forward pass) ----
FEAT_DIM = 32          # embedding_dim
N_HEADS = 8
N_LAYERS = 6
MLM_BSZ = 2
MLM_LENGTH = 4
MLM_AGENTS = 2
NUM_AGENTS = MLM_AGENTS
SEQ_LEN = MLM_LENGTH * MLM_AGENTS        # N = 8
BN_EPS = 1e-5


# ------------------------------ Pallas kernel ------------------------------
def _attn_stack_kernel(x_ref, add_ref, band_ref, ones_ref,
                       wqkv_ref, wo_ref, w1_ref, w2_ref,
                       bo_ref, b1_ref, b2_ref,
                       g1_ref, be1_ref, g2_ref, be2_ref,
                       out_ref):
    R, D = out_ref.shape                      # R = B*N rows, D = feat dim
    B, N, H = MLM_BSZ, SEQ_LEN, N_HEADS
    inv_r = 1.0 / R

    band = band_ref[...]                      # (H*N, D) 0/1 head-band mask, f32
    ones_blk = ones_ref[...]                  # (H*N, H*N) block-diag ones, f32
    x0 = x_ref[...] + add_ref[...]            # + segment + positional, (R, D) f32

    def layer(l, x2):
        # ---- fused QKV projection: one (R,D)@(D,3D) MXU op, bf16 in / f32 acc.
        #      Slices & reshapes stay in f32 (clean (8,128) tiles).
        qkv = jnp.dot(x2.astype(jnp.bfloat16), wqkv_ref[l],
                      preferred_element_type=jnp.float32)          # (R, 3D) f32
        qkv3 = qkv.reshape(B, N, 3 * D)
        q = qkv3[:, :, 0:D]                                        # (B, N, D)
        k = qkv3[:, :, D:2 * D]
        v = qkv3[:, :, 2 * D:3 * D]

        # ---- block-diagonal multi-head attention ----
        # Tile K/V across heads, zero features outside each head's band:
        #   k_big[b, h*N + j, :] = k[b, j, :] * band[h*N + j]  -> (B, H*N, D)
        k_big = (jnp.concatenate([k] * H, axis=1) * band).astype(jnp.bfloat16)
        v_big = (jnp.concatenate([v] * H, axis=1) * band).astype(jnp.bfloat16)

        # One B-batched score matmul; column block h of the H*N axis = q_h@k_h^T.
        # (The 1/sqrt(head_dim) scale is folded into Wq at prepare time.)
        s = jnp.einsum('bid,bjd->bij', q.astype(jnp.bfloat16), k_big,
                       preferred_element_type=jnp.float32)         # (B, N, H*N)
        # Row-global max shift is valid per head (same constant per row).
        s = s - jnp.max(s, axis=-1, keepdims=True)
        e = jnp.exp(s)
        # Grouped (per-head) softmax denominators via one block-diag ones
        # matmul; result is already broadcast along each head block.
        denom = jnp.einsum('bij,jk->bik', e, ones_blk,
                           preferred_element_type=jnp.float32)
        p = (e * pl.reciprocal(denom, approx=True)).astype(jnp.bfloat16)

        # One B-batched PV matmul; output is already head-concatenated.
        o = jnp.einsum('bij,bjd->bid', p, v_big,
                       preferred_element_type=jnp.float32)         # (B, N, D)

        # ---- output projection (multi_head_combine) + bias + residual ----
        mh = jnp.dot(o.reshape(R, D).astype(jnp.bfloat16), wo_ref[l],
                     preferred_element_type=jnp.float32)
        y = x2 + mh + bo_ref[l]

        # ---- norm1: BatchNorm1d (training mode), one-pass stats in f32 ----
        mu1 = jnp.sum(y, axis=0, keepdims=True) * inv_r
        ms1 = jnp.sum(y * y, axis=0, keepdims=True) * inv_r
        y = (y - mu1) * lax.rsqrt(ms1 - mu1 * mu1 + BN_EPS) * g1_ref[l] + be1_ref[l]

        # ---- feed forward (D -> 4D -> D) with residual ----
        hmid = jnp.maximum(
            jnp.dot(y.astype(jnp.bfloat16), w1_ref[l],
                    preferred_element_type=jnp.float32) + b1_ref[l], 0.0)
        z = y + jnp.dot(hmid.astype(jnp.bfloat16), w2_ref[l],
                        preferred_element_type=jnp.float32) + b2_ref[l]

        # ---- norm2 ----
        mu2 = jnp.sum(z, axis=0, keepdims=True) * inv_r
        ms2 = jnp.sum(z * z, axis=0, keepdims=True) * inv_r
        return (z - mu2) * lax.rsqrt(ms2 - mu2 * mu2 + BN_EPS) * g2_ref[l] + be2_ref[l]

    # fori_loop over layers bounds live ranges (a fully unrolled 6-layer body
    # risks vreg spills); weights are indexed dynamically on the major axis.
    out_ref[...] = lax.fori_loop(0, N_LAYERS, layer, x0)


# ------------------------------ wrapper / glue ------------------------------
def attention_module_forward(seq_feat, prep):
    """Per-call path: reshape + a single pallas_call. All packing is in prep."""
    B, N, D = seq_feat.shape
    R = B * N
    vmem = pl.BlockSpec(memory_space=pltpu.MemorySpace.VMEM)
    out2 = pl.pallas_call(
        _attn_stack_kernel,
        out_shape=jax.ShapeDtypeStruct((R, D), jnp.float32),
        in_specs=[vmem] * 15,
        out_specs=vmem,
    )(seq_feat.reshape(R, D), prep['addend'], prep['band'], prep['ones_blk'],
      prep['wqkv'], prep['wo'], prep['w1'], prep['w2'],
      prep['bo'], prep['b1'], prep['b2'],
      prep['g1'], prep['be1'], prep['g2'], prep['be2'])
    return out2.reshape(B, N, D)


def prepare_kernel_params(params):
    """One-time (hoisted) packing: weight fusion, bf16 casts, constant masks,
    segment+position addend. Not on the per-call path."""
    D, H, N, L = FEAT_DIM, N_HEADS, SEQ_LEN, N_LAYERS
    hd = D // H
    scale = 1.0 / math.sqrt(hd)

    # Fold the attention score scale into Wq; fuse Wq|Wk|Wv; pre-cast to bf16.
    wqkv = jnp.concatenate([params['wq'] * scale, params['wk'], params['wv']],
                           axis=2).astype(jnp.bfloat16)            # (L, D, 3D)

    # Constant head-band mask (H*N, D): row block h keeps features of head h.
    row_head = jnp.repeat(jnp.arange(H), N)                        # (H*N,)
    col_head = jnp.arange(D) // hd                                 # (D,)
    band = (row_head[:, None] == col_head[None, :]).astype(jnp.float32)
    # Block-diagonal ones (H*N, H*N) for grouped softmax denominators.
    ones_blk = (row_head[:, None] == row_head[None, :]).astype(jnp.float32)

    # Segment + positional addend (input independent).
    segment, pos = build_segment_and_position(params, (MLM_BSZ, N, D))
    addend = (segment + pos).reshape(MLM_BSZ * N, D).astype(jnp.float32)

    return {
        'wqkv': wqkv,
        'wo': params['wo'].astype(jnp.bfloat16),                   # (L, D, D)
        'w1': params['w1'].astype(jnp.bfloat16),                   # (L, D, 4D)
        'w2': params['w2'].astype(jnp.bfloat16),                   # (L, 4D, D)
        'bo': params['bo'], 'b1': params['b1'], 'b2': params['b2'],
        'g1': params['g1'], 'be1': params['be1'],
        'g2': params['g2'], 'be2': params['be2'],
        'band': band, 'ones_blk': ones_blk, 'addend': addend,
    }


def positional_embedding(d_model, max_len=128):
    position = jnp.arange(max_len, dtype=jnp.float32)[:, None]
    div_term = jnp.exp(jnp.arange(0, d_model, 2, dtype=jnp.float32)
                       * -(math.log(10000.0) / d_model))
    ang = position * div_term                                      # (max_len, d/2)
    pe = jnp.stack([jnp.sin(ang), jnp.cos(ang)], axis=-1).reshape(max_len, d_model)
    return pe[None]                                                # (1, max_len, d)


def build_segment_and_position(params, seq_shape):
    B, N, D = seq_shape
    if MLM_AGENTS > 1:
        seg_ids = jnp.repeat(
            jnp.array([[i] * MLM_LENGTH for i in range(MLM_AGENTS)], jnp.int32),
            MLM_BSZ, axis=0)                                       # (agents*bsz, length)
        segment = params['seg_emb'][seg_ids].reshape(B, N, D)      # .view_as(seq_feat)
    else:
        segment = jnp.zeros((B, N, D), jnp.float32)
    if MLM_LENGTH > 1:
        pos = positional_embedding(D)[:, :N]                       # (1, N, D)
    else:
        pos = jnp.zeros((1, N, D), jnp.float32)
    return segment, pos


def init_params(key):
    D, D4, L = FEAT_DIM, 4 * FEAT_DIM, N_LAYERS
    ks = jax.random.split(key, 10)

    def w(k, shape, fan_in):
        return jax.random.normal(k, shape, jnp.float32) / math.sqrt(fan_in)

    return {
        # Linear weights stored pre-transposed: (layer, in, out)
        'wq': w(ks[0], (L, D, D), D),
        'wk': w(ks[1], (L, D, D), D),
        'wv': w(ks[2], (L, D, D), D),
        'wo': w(ks[3], (L, D, D), D),
        'bo': w(ks[4], (L, 1, D), D),
        'w1': w(ks[5], (L, D, D4), D),
        'b1': w(ks[6], (L, 1, D4), D),
        'w2': w(ks[7], (L, D4, D), D4),
        'b2': w(ks[8], (L, 1, D), D4),
        'g1': jnp.ones((L, 1, D), jnp.float32),
        'be1': jnp.zeros((L, 1, D), jnp.float32),
        'g2': jnp.ones((L, 1, D), jnp.float32),
        'be2': jnp.zeros((L, 1, D), jnp.float32),
        'seg_emb': jax.random.normal(ks[9], (NUM_AGENTS, D), jnp.float32),
    }


# ---------------------- plain-JAX reference (for check) ----------------------
def reference_forward(seq_feat, segment, pos, params):
    B, N, D = seq_feat.shape
    H, hd = N_HEADS, FEAT_DIM // N_HEADS
    x = seq_feat + segment + pos
    for l in range(N_LAYERS):
        x2 = x.reshape(B * N, D)
        q = (x2 @ params['wq'][l]).reshape(B, N, H, hd).transpose(0, 2, 1, 3)
        k = (x2 @ params['wk'][l]).reshape(B, N, H, hd).transpose(0, 2, 1, 3)
        v = (x2 @ params['wv'][l]).reshape(B, N, H, hd).transpose(0, 2, 1, 3)
        s = jnp.einsum('bhid,bhjd->bhij', q, k) / math.sqrt(hd)
        p = jax.nn.softmax(s, axis=-1)
        o = jnp.einsum('bhij,bhjd->bhid', p, v).transpose(0, 2, 1, 3).reshape(B * N, D)
        y = x2 + o @ params['wo'][l] + params['bo'][l, 0]
        mu = y.mean(0, keepdims=True)
        var = ((y - mu) ** 2).mean(0, keepdims=True)
        y = (y - mu) / jnp.sqrt(var + BN_EPS) * params['g1'][l, 0] + params['be1'][l, 0]
        h = jax.nn.relu(y @ params['w1'][l] + params['b1'][l, 0])
        z = y + h @ params['w2'][l] + params['b2'][l, 0]
        mu2 = z.mean(0, keepdims=True)
        var2 = ((z - mu2) ** 2).mean(0, keepdims=True)
        z = (z - mu2) / jnp.sqrt(var2 + BN_EPS) * params['g2'][l, 0] + params['be2'][l, 0]
        x = z.reshape(B, N, D)
    return x


if __name__ == "__main__":
    key = jax.random.PRNGKey(0)
    kp, kx = jax.random.split(key)
    params = init_params(kp)
    prep = prepare_kernel_params(params)          # one-time packing (hoisted)
    seq_feat = jax.random.normal(kx, (MLM_BSZ, SEQ_LEN, FEAT_DIM), jnp.float32)

    fwd = jax.jit(attention_module_forward)
    out = fwd(seq_feat, prep)
    out = jax.block_until_ready(out)

    segment, pos = build_segment_and_position(params, seq_feat.shape)
    ref = reference_forward(seq_feat, segment, pos, params)
    assert out.shape == seq_feat.shape
    assert bool(jnp.all(jnp.isfinite(out)))
    # bf16 MXU operands + approx reciprocal vs. the pure-f32 reference:
    # tolerance widened accordingly; real structural bugs produce O(1) errors.
    assert float(jnp.max(jnp.abs(out - ref))) < 1e-1

    print("KERNEL_OK")
</pallas_src>

<mosaic_0001>
module attributes {stable_mosaic.version = 11 : i64} {
  func.func @_attn_stack_kernel(%arg0: memref<16x32xf32, #tpu.memory_space<vmem>>, %arg1: memref<16x32xf32, #tpu.memory_space<vmem>>, %arg2: memref<64x32xf32, #tpu.memory_space<vmem>>, %arg3: memref<64x64xf32, #tpu.memory_space<vmem>>, %arg4: memref<6x32x96xbf16, #tpu.memory_space<vmem>>, %arg5: memref<6x32x32xbf16, #tpu.memory_space<vmem>>, %arg6: memref<6x32x128xbf16, #tpu.memory_space<vmem>>, %arg7: memref<6x128x32xbf16, #tpu.memory_space<vmem>>, %arg8: memref<6x1x32xf32, #tpu.memory_space<vmem>>, %arg9: memref<6x1x128xf32, #tpu.memory_space<vmem>>, %arg10: memref<6x1x32xf32, #tpu.memory_space<vmem>>, %arg11: memref<6x1x32xf32, #tpu.memory_space<vmem>>, %arg12: memref<6x1x32xf32, #tpu.memory_space<vmem>>, %arg13: memref<6x1x32xf32, #tpu.memory_space<vmem>>, %arg14: memref<6x1x32xf32, #tpu.memory_space<vmem>>, %arg15: memref<16x32xf32, #tpu.memory_space<vmem>>) attributes {dimension_semantics = [], scalar_prefetch = 0 : i64, scratch_operands = 0 : i64, tpu.core_type = #tpu.core_type<tc>} {
    %c0 = arith.constant 0 : index
    %c0_0 = arith.constant 0 : index
    %0 = vector.load %arg2[%c0, %c0_0] : memref<64x32xf32, #tpu.memory_space<vmem>>, vector<64x32xf32>
    %c0_1 = arith.constant 0 : index
    %c0_2 = arith.constant 0 : index
    %1 = vector.load %arg3[%c0_1, %c0_2] : memref<64x64xf32, #tpu.memory_space<vmem>>, vector<64x64xf32>
    %c0_3 = arith.constant 0 : index
    %c0_4 = arith.constant 0 : index
    %2 = vector.load %arg0[%c0_3, %c0_4] : memref<16x32xf32, #tpu.memory_space<vmem>>, vector<16x32xf32>
    %c0_5 = arith.constant 0 : index
    %c0_6 = arith.constant 0 : index
    %3 = vector.load %arg1[%c0_5, %c0_6] : memref<16x32xf32, #tpu.memory_space<vmem>>, vector<16x32xf32>
    %4 = arith.addf %2, %3 : vector<16x32xf32>
    %c0_i32 = arith.constant 0 : i32
    %c6_i32 = arith.constant 6 : i32
    %5 = arith.addi %c0_i32, %c6_i32 : i32
    %c1_i32 = arith.constant 1 : i32
    %6 = scf.for %arg16 = %c0_i32 to %5 step %c1_i32 iter_args(%arg17 = %4) -> (vector<16x32xf32>)  : i32 {
      %8 = arith.truncf %arg17 : vector<16x32xf32> to vector<16x32xbf16>
      %9 = arith.index_cast %arg16 : i32 to index
      %c0_10 = arith.constant 0 : index
      %c0_11 = arith.constant 0 : index
      %10 = vector.load %arg4[%9, %c0_10, %c0_11] : memref<6x32x96xbf16, #tpu.memory_space<vmem>>, vector<1x32x96xbf16>
      %11 = vector.shape_cast %10 : vector<1x32x96xbf16> to vector<32x96xbf16>
      %cst = arith.constant dense<0.000000e+00> : vector<16x96xf32>
      %12 = tpu.matmul %8, %11, %cst {dimension_numbers = #tpu.dot_dimension_numbers<[1], [0], [0], [1], [0, 0, 1, 1], [], []>} : vector<16x32xbf16>, vector<32x96xbf16>, vector<16x96xf32> -> vector<16x96xf32>
      %13 = vector.shape_cast %12 : vector<16x96xf32> to vector<2x8x96xf32>
      %14 = vector.extract_strided_slice %13 {offsets = [0, 0, 0], sizes = [2, 8, 32], strides = [1, 1, 1]} : vector<2x8x96xf32> to vector<2x8x32xf32>
      %15 = vector.extract_strided_slice %13 {offsets = [0, 0, 32], sizes = [2, 8, 32], strides = [1, 1, 1]} : vector<2x8x96xf32> to vector<2x8x32xf32>
      %16 = vector.extract_strided_slice %13 {offsets = [0, 0, 64], sizes = [2, 8, 32], strides = [1, 1, 1]} : vector<2x8x96xf32> to vector<2x8x32xf32>
      %17 = tpu.concatenate %15, %15, %15, %15, %15, %15, %15, %15 in 1 : vector<2x8x32xf32>, vector<2x8x32xf32>, vector<2x8x32xf32>, vector<2x8x32xf32>, vector<2x8x32xf32>, vector<2x8x32xf32>, vector<2x8x32xf32>, vector<2x8x32xf32> -> vector<2x64x32xf32>
      %18 = vector.shape_cast %0 : vector<64x32xf32> to vector<1x64x32xf32>
      %19 = vector.broadcast %18 : vector<1x64x32xf32> to vector<2x64x32xf32>
      %20 = arith.mulf %17, %19 : vector<2x64x32xf32>
      %21 = arith.truncf %20 : vector<2x64x32xf32> to vector<2x64x32xbf16>
      %22 = tpu.concatenate %16, %16, %16, %16, %16, %16, %16, %16 in 1 : vector<2x8x32xf32>, vector<2x8x32xf32>, vector<2x8x32xf32>, vector<2x8x32xf32>, vector<2x8x32xf32>, vector<2x8x32xf32>, vector<2x8x32xf32>, vector<2x8x32xf32> -> vector<2x64x32xf32>
      %23 = vector.shape_cast %0 : vector<64x32xf32> to vector<1x64x32xf32>
      %24 = vector.broadcast %23 : vector<1x64x32xf32> to vector<2x64x32xf32>
      %25 = arith.mulf %22, %24 : vector<2x64x32xf32>
      %26 = arith.truncf %25 : vector<2x64x32xf32> to vector<2x64x32xbf16>
      %27 = arith.truncf %14 : vector<2x8x32xf32> to vector<2x8x32xbf16>
      "tpu.trace_start"() <{level = 10 : i32, message = "bid,bjd->bij"}> : () -> ()
      %cst_12 = arith.constant dense<0.000000e+00> : vector<2x8x64xf32>
      %28 = tpu.matmul %27, %21, %cst_12 {dimension_numbers = #tpu.dot_dimension_numbers<[2], [2], [1], [1], [0, 0, 0, 1, 1, 1], [0], [0]>} : vector<2x8x32xbf16>, vector<2x64x32xbf16>, vector<2x8x64xf32> -> vector<2x8x64xf32>
      "tpu.trace_stop"() : () -> ()
      %cst_13 = arith.constant dense<0xFF800000> : vector<2x8xf32>
      %29 = vector.multi_reduction <maximumf>, %28, %cst_13 [2] : vector<2x8x64xf32> to vector<2x8xf32>
      %30 = vector.shape_cast %29 : vector<2x8xf32> to vector<2x8x1xf32>
      %31 = vector.broadcast %30 : vector<2x8x1xf32> to vector<2x8x64xf32>
      %32 = arith.subf %28, %31 : vector<2x8x64xf32>
      %33 = math.exp %32 : vector<2x8x64xf32>
      "tpu.trace_start"() <{level = 10 : i32, message = "bij,jk->bik"}> : () -> ()
      %cst_14 = arith.constant dense<0.000000e+00> : vector<2x8x64xf32>
      %34 = tpu.matmul %33, %1, %cst_14 {dimension_numbers = #tpu.dot_dimension_numbers<[2], [0], [0, 1], [1], [0, 0, 0, 1, 1, 1], [], []>} : vector<2x8x64xf32>, vector<64x64xf32>, vector<2x8x64xf32> -> vector<2x8x64xf32>
      "tpu.trace_stop"() : () -> ()
      %35 = tpu.reciprocal %34 {approx = true} : vector<2x8x64xf32> -> vector<2x8x64xf32>
      %36 = arith.mulf %33, %35 : vector<2x8x64xf32>
      %37 = arith.truncf %36 : vector<2x8x64xf32> to vector<2x8x64xbf16>
      "tpu.trace_start"() <{level = 10 : i32, message = "bij,bjd->bid"}> : () -> ()
      %cst_15 = arith.constant dense<0.000000e+00> : vector<2x8x32xf32>
      %38 = tpu.matmul %37, %26, %cst_15 {dimension_numbers = #tpu.dot_dimension_numbers<[2], [1], [1], [2], [0, 0, 0, 1, 1, 2], [0], [0]>} : vector<2x8x64xbf16>, vector<2x64x32xbf16>, vector<2x8x32xf32> -> vector<2x8x32xf32>
      "tpu.trace_stop"() : () -> ()
      %39 = vector.shape_cast %38 : vector<2x8x32xf32> to vector<16x32xf32>
      %40 = arith.truncf %39 : vector<16x32xf32> to vector<16x32xbf16>
      %41 = arith.index_cast %arg16 : i32 to index
      %c0_16 = arith.constant 0 : index
      %c0_17 = arith.constant 0 : index
      %42 = vector.load %arg5[%41, %c0_16, %c0_17] : memref<6x32x32xbf16, #tpu.memory_space<vmem>>, vector<1x32x32xbf16>
      %43 = vector.shape_cast %42 : vector<1x32x32xbf16> to vector<32x32xbf16>
      %cst_18 = arith.constant dense<0.000000e+00> : vector<16x32xf32>
      %44 = tpu.matmul %40, %43, %cst_18 {dimension_numbers = #tpu.dot_dimension_numbers<[1], [0], [0], [1], [0, 0, 1, 1], [], []>} : vector<16x32xbf16>, vector<32x32xbf16>, vector<16x32xf32> -> vector<16x32xf32>
      %45 = arith.addf %arg17, %44 : vector<16x32xf32>
      %46 = arith.index_cast %arg16 : i32 to index
      %c0_19 = arith.constant 0 : index
      %c0_20 = arith.constant 0 : index
      %47 = vector.load %arg8[%46, %c0_19, %c0_20] : memref<6x1x32xf32, #tpu.memory_space<vmem>>, vector<1x1x32xf32>
      %48 = vector.shape_cast %47 : vector<1x1x32xf32> to vector<1x32xf32>
      %49 = vector.broadcast %48 : vector<1x32xf32> to vector<16x32xf32>
      %50 = arith.addf %45, %49 : vector<16x32xf32>
      %cst_21 = arith.constant dense<0.000000e+00> : vector<32xf32>
      %51 = vector.multi_reduction <add>, %50, %cst_21 [0] : vector<16x32xf32> to vector<32xf32>
      %52 = vector.shape_cast %51 : vector<32xf32> to vector<1x32xf32>
      %cst_22 = arith.constant 6.250000e-02 : f32
      %53 = vector.broadcast %cst_22 : f32 to vector<1x32xf32>
      %54 = arith.mulf %52, %53 : vector<1x32xf32>
      %55 = arith.mulf %50, %50 : vector<16x32xf32>
      %cst_23 = arith.constant dense<0.000000e+00> : vector<32xf32>
      %56 = vector.multi_reduction <add>, %55, %cst_23 [0] : vector<16x32xf32> to vector<32xf32>
      %57 = vector.shape_cast %56 : vector<32xf32> to vector<1x32xf32>
      %cst_24 = arith.constant 6.250000e-02 : f32
      %58 = vector.broadcast %cst_24 : f32 to vector<1x32xf32>
      %59 = arith.mulf %57, %58 : vector<1x32xf32>
      %60 = vector.broadcast %54 : vector<1x32xf32> to vector<16x32xf32>
      %61 = arith.subf %50, %60 : vector<16x32xf32>
      %62 = arith.mulf %54, %54 : vector<1x32xf32>
      %63 = arith.subf %59, %62 : vector<1x32xf32>
      %cst_25 = arith.constant 9.99999974E-6 : f32
      %64 = vector.broadcast %cst_25 : f32 to vector<1x32xf32>
      %65 = arith.addf %63, %64 : vector<1x32xf32>
      %66 = math.rsqrt %65 : vector<1x32xf32>
      %67 = vector.broadcast %66 : vector<1x32xf32> to vector<16x32xf32>
      %68 = arith.mulf %61, %67 : vector<16x32xf32>
      %69 = arith.index_cast %arg16 : i32 to index
      %c0_26 = arith.constant 0 : index
      %c0_27 = arith.constant 0 : index
      %70 = vector.load %arg11[%69, %c0_26, %c0_27] : memref<6x1x32xf32, #tpu.memory_space<vmem>>, vector<1x1x32xf32>
      %71 = vector.shape_cast %70 : vector<1x1x32xf32> to vector<1x32xf32>
      %72 = vector.broadcast %71 : vector<1x32xf32> to vector<16x32xf32>
      %73 = arith.mulf %68, %72 : vector<16x32xf32>
      %74 = arith.index_cast %arg16 : i32 to index
      %c0_28 = arith.constant 0 : index
      %c0_29 = arith.constant 0 : index
      %75 = vector.load %arg12[%74, %c0_28, %c0_29] : memref<6x1x32xf32, #tpu.memory_space<vmem>>, vector<1x1x32xf32>
      %76 = vector.shape_cast %75 : vector<1x1x32xf32> to vector<1x32xf32>
      %77 = vector.broadcast %76 : vector<1x32xf32> to vector<16x32xf32>
      %78 = arith.addf %73, %77 : vector<16x32xf32>
      %79 = arith.truncf %78 : vector<16x32xf32> to vector<16x32xbf16>
      %80 = arith.index_cast %arg16 : i32 to index
      %c0_30 = arith.constant 0 : index
      %c0_31 = arith.constant 0 : index
      %81 = vector.load %arg6[%80, %c0_30, %c0_31] : memref<6x32x128xbf16, #tpu.memory_space<vmem>>, vector<1x32x128xbf16>
      %82 = vector.shape_cast %81 : vector<1x32x128xbf16> to vector<32x128xbf16>
      %cst_32 = arith.constant dense<0.000000e+00> : vector<16x128xf32>
      %83 = tpu.matmul %79, %82, %cst_32 {dimension_numbers = #tpu.dot_dimension_numbers<[1], [0], [0], [1], [0, 0, 1, 1], [], []>} : vector<16x32xbf16>, vector<32x128xbf16>, vector<16x128xf32> -> vector<16x128xf32>
      %84 = arith.index_cast %arg16 : i32 to index
      %c0_33 = arith.constant 0 : index
      %c0_34 = arith.constant 0 : index
      %85 = vector.load %arg9[%84, %c0_33, %c0_34] : memref<6x1x128xf32, #tpu.memory_space<vmem>>, vector<1x1x128xf32>
      %86 = vector.shape_cast %85 : vector<1x1x128xf32> to vector<1x128xf32>
      %87 = vector.broadcast %86 : vector<1x128xf32> to vector<16x128xf32>
      %88 = arith.addf %83, %87 : vector<16x128xf32>
      %cst_35 = arith.constant 0.000000e+00 : f32
      %89 = vector.broadcast %cst_35 : f32 to vector<16x128xf32>
      %90 = arith.maximumf %88, %89 : vector<16x128xf32>
      %91 = arith.truncf %90 : vector<16x128xf32> to vector<16x128xbf16>
      %92 = arith.index_cast %arg16 : i32 to index
      %c0_36 = arith.constant 0 : index
      %c0_37 = arith.constant 0 : index
      %93 = vector.load %arg7[%92, %c0_36, %c0_37] : memref<6x128x32xbf16, #tpu.memory_space<vmem>>, vector<1x128x32xbf16>
      %94 = vector.shape_cast %93 : vector<1x128x32xbf16> to vector<128x32xbf16>
      %cst_38 = arith.constant dense<0.000000e+00> : vector<16x32xf32>
      %95 = tpu.matmul %91, %94, %cst_38 {dimension_numbers = #tpu.dot_dimension_numbers<[1], [0], [0], [1], [0, 0, 1, 1], [], []>} : vector<16x128xbf16>, vector<128x32xbf16>, vector<16x32xf32> -> vector<16x32xf32>
      %96 = arith.addf %78, %95 : vector<16x32xf32>
      %97 = arith.index_cast %arg16 : i32 to index
      %c0_39 = arith.constant 0 : index
      %c0_40 = arith.constant 0 : index
      %98 = vector.load %arg10[%97, %c0_39, %c0_40] : memref<6x1x32xf32, #tpu.memory_space<vmem>>, vector<1x1x32xf32>
      %99 = vector.shape_cast %98 : vector<1x1x32xf32> to vector<1x32xf32>
      %100 = vector.broadcast %99 : vector<1x32xf32> to vector<16x32xf32>
      %101 = arith.addf %96, %100 : vector<16x32xf32>
      %cst_41 = arith.constant dense<0.000000e+00> : vector<32xf32>
      %102 = vector.multi_reduction <add>, %101, %cst_41 [0] : vector<16x32xf32> to vector<32xf32>
      %103 = vector.shape_cast %102 : vector<32xf32> to vector<1x32xf32>
      %cst_42 = arith.constant 6.250000e-02 : f32
      %104 = vector.broadcast %cst_42 : f32 to vector<1x32xf32>
      %105 = arith.mulf %103, %104 : vector<1x32xf32>
      %106 = arith.mulf %101, %101 : vector<16x32xf32>
      %cst_43 = arith.constant dense<0.000000e+00> : vector<32xf32>
      %107 = vector.multi_reduction <add>, %106, %cst_43 [0] : vector<16x32xf32> to vector<32xf32>
      %108 = vector.shape_cast %107 : vector<32xf32> to vector<1x32xf32>
      %cst_44 = arith.constant 6.250000e-02 : f32
      %109 = vector.broadcast %cst_44 : f32 to vector<1x32xf32>
      %110 = arith.mulf %108, %109 : vector<1x32xf32>
      %111 = vector.broadcast %105 : vector<1x32xf32> to vector<16x32xf32>
      %112 = arith.subf %101, %111 : vector<16x32xf32>
      %113 = arith.mulf %105, %105 : vector<1x32xf32>
      %114 = arith.subf %110, %113 : vector<1x32xf32>
      %cst_45 = arith.constant 9.99999974E-6 : f32
      %115 = vector.broadcast %cst_45 : f32 to vector<1x32xf32>
      %116 = arith.addf %114, %115 : vector<1x32xf32>
      %117 = math.rsqrt %116 : vector<1x32xf32>
      %118 = vector.broadcast %117 : vector<1x32xf32> to vector<16x32xf32>
      %119 = arith.mulf %112, %118 : vector<16x32xf32>
      %120 = arith.index_cast %arg16 : i32 to index
      %c0_46 = arith.constant 0 : index
      %c0_47 = arith.constant 0 : index
      %121 = vector.load %arg13[%120, %c0_46, %c0_47] : memref<6x1x32xf32, #tpu.memory_space<vmem>>, vector<1x1x32xf32>
      %122 = vector.shape_cast %121 : vector<1x1x32xf32> to vector<1x32xf32>
      %123 = vector.broadcast %122 : vector<1x32xf32> to vector<16x32xf32>
      %124 = arith.mulf %119, %123 : vector<16x32xf32>
      %125 = arith.index_cast %arg16 : i32 to index
      %c0_48 = arith.constant 0 : index
      %c0_49 = arith.constant 0 : index
      %126 = vector.load %arg14[%125, %c0_48, %c0_49] : memref<6x1x32xf32, #tpu.memory_space<vmem>>, vector<1x1x32xf32>
      %127 = vector.shape_cast %126 : vector<1x1x32xf32> to vector<1x32xf32>
      %128 = vector.broadcast %127 : vector<1x32xf32> to vector<16x32xf32>
      %129 = arith.addf %124, %128 : vector<16x32xf32>
      scf.yield %129 : vector<16x32xf32>
    }
    %c6_i32_7 = arith.constant 6 : i32
    %c0_8 = arith.constant 0 : index
    %c0_9 = arith.constant 0 : index
    %7 = vector.load %arg15[%c0_8, %c0_9] : memref<16x32xf32, #tpu.memory_space<vmem>>, vector<16x32xf32>
    tpu.vector_store %arg15[%c0_8, %c0_9], %6 {strides = array<i32>} : memref<16x32xf32, #tpu.memory_space<vmem>>, vector<16x32xf32>,
    return
  }
}

</mosaic_0001>

<llo_original>
// kernel: attention_module_forward.1
$region0: #{attention_module_forward.1}
  #allocation0 [shape = 'u32[]', space=smem, size = 0x4, offset = 0x4, fixed_abs, tag = 'smem constant byte address 0x4 - core index']
  #allocation1 [shape = 'u32[144,128]{1,0:T(1,128)}', space=vmem, size = 0x12000, scoped, tag = 'internal scratch']
  %s0 = inlined_call_operand.vmem [shape: f32[16,32], index: 0, kind: input, shape index: {}]
  %s1 = inlined_call_operand.vmem [shape: f32[16,32], index: 1, kind: input, shape index: {}]
  %s2 = inlined_call_operand.vmem [shape: f32[64,32], index: 2, kind: input, shape index: {}]
  %s3 = inlined_call_operand.vmem [shape: f32[64,64], index: 3, kind: input, shape index: {}]
  %s4 = inlined_call_operand.vmem [shape: bf16[6,32,96], index: 4, kind: input, shape index: {}]
  %s5 = inlined_call_operand.vmem [shape: bf16[6,32,32], index: 5, kind: input, shape index: {}]
  %s6 = inlined_call_operand.vmem [shape: bf16[6,32,128], index: 6, kind: input, shape index: {}]
  %s7 = inlined_call_operand.vmem [shape: bf16[6,128,32], index: 7, kind: input, shape index: {}]
  %s8 = inlined_call_operand.vmem [shape: f32[6,1,32], index: 8, kind: input, shape index: {}]
  %s9 = inlined_call_operand.vmem [shape: f32[6,1,128], index: 9, kind: input, shape index: {}]
  %s10 = inlined_call_operand.vmem [shape: f32[6,1,32], index: 10, kind: input, shape index: {}]
  %s11 = inlined_call_operand.vmem [shape: f32[6,1,32], index: 11, kind: input, shape index: {}]
  %s12 = inlined_call_operand.vmem [shape: f32[6,1,32], index: 12, kind: input, shape index: {}]
  %s13 = inlined_call_operand.vmem [shape: f32[6,1,32], index: 13, kind: input, shape index: {}]
  %s14 = inlined_call_operand.vmem [shape: f32[6,1,32], index: 14, kind: input, shape index: {}]
  %s15 = inlined_call_operand.hbm [shape: f32[16,32], index: 15, kind: output, shape index: {}]
  %s16 = sld [smem:[#allocation0]]
  $region77: #{attention_module_forward.1} parent=0
    _
  %s18 = ssub.s32 1, %s16
  %s19 = scalar_select 0, %s18, %s16
  $region1: #{attention_module_forward.1} parent=0
    #allocation2 [shape = 'u8[8192]{0}', space=vmem, size = 0x2000, scoped, tag = 'output window, operand 0, single buffered']
    #allocation3 [shape = 's32[1]{0}', space=sflag, size = 0x4, scoped, tag = 'scoped memory for attention_module_forward.1']
    %20 = vsyncpa [#allocation3], 0
    // Predicated region
    $region2: #{attention_module_forward.1} parent=1 // pred_check
      _
    $region3: #{attention_module_forward.1} parent=1 // pred_check_branch
      %22 = sbr.rel (0) target = $region5
    $region4: #{attention_module_forward.1} parent=1 // pred_region
      _
    $region5: #{attention_module_forward.1} parent=1 // pred_fallthru
      _
    // Predicated region
    $region6: #{attention_module_forward.1} parent=1 // pred_check
      _
    $region7: #{attention_module_forward.1} parent=1 // pred_check_branch
      %24 = sbr.rel (0) target = $region9
    $region8: #{attention_module_forward.1} parent=1 // pred_region
      _
    $region9: #{attention_module_forward.1} parent=1 // pred_fallthru
      _
    // Predicated region
    $region10: #{attention_module_forward.1} parent=1 // pred_check
      _
    $region11: #{attention_module_forward.1} parent=1 // pred_check_branch
      %26 = sbr.rel (0) target = $region13
    $region12: #{attention_module_forward.1} parent=1 // pred_region
      _
    $region13: #{attention_module_forward.1} parent=1 // pred_fallthru
      _
    // Predicated region
    $region14: #{attention_module_forward.1} parent=1 // pred_check
      _
    $region15: #{attention_module_forward.1} parent=1 // pred_check_branch
      %28 = sbr.rel (0) target = $region17
    $region16: #{attention_module_forward.1} parent=1 // pred_region
      _
    $region17: #{attention_module_forward.1} parent=1 // pred_fallthru
      _
    // Predicated region
    $region18: #{attention_module_forward.1} parent=1 // pred_check
      _
    $region19: #{attention_module_forward.1} parent=1 // pred_check_branch
      %30 = sbr.rel (0) target = $region21
    $region20: #{attention_module_forward.1} parent=1 // pred_region
      _
    $region21: #{attention_module_forward.1} parent=1 // pred_fallthru
      _
    // Predicated region
    $region22: #{attention_module_forward.1} parent=1 // pred_check
      _
    $region23: #{attention_module_forward.1} parent=1 // pred_check_branch
      %32 = sbr.rel (0) target = $region25
    $region24: #{attention_module_forward.1} parent=1 // pred_region
      _
    $region25: #{attention_module_forward.1} parent=1 // pred_fallthru
      _
    // Predicated region
    $region26: #{attention_module_forward.1} parent=1 // pred_check
      _
    $region27: #{attention_module_forward.1} parent=1 // pred_check_branch
      %34 = sbr.rel (0) target = $region29
    $region28: #{attention_module_forward.1} parent=1 // pred_region
      _
    $region29: #{attention_module_forward.1} parent=1 // pred_fallthru
      _
    // Predicated region
    $region30: #{attention_module_forward.1} parent=1 // pred_check
      _
    $region31: #{attention_module_forward.1} parent=1 // pred_check_branch
      %36 = sbr.rel (0) target = $region33
    $region32: #{attention_module_forward.1} parent=1 // pred_region
      _
    $region33: #{attention_module_forward.1} parent=1 // pred_fallthru
      _
    // Predicated region
    $region34: #{attention_module_forward.1} parent=1 // pred_check
      _
    $region35: #{attention_module_forward.1} parent=1 // pred_check_branch
      %38 = sbr.rel (0) target = $region37
    $region36: #{attention_module_forward.1} parent=1 // pred_region
      _
    $region37: #{attention_module_forward.1} parent=1 // pred_fallthru
      _
    // Predicated region
    $region38: #{attention_module_forward.1} parent=1 // pred_check
      _
    $region39: #{attention_module_forward.1} parent=1 // pred_check_branch
      %40 = sbr.rel (0) target = $region41
    $region40: #{attention_module_forward.1} parent=1 // pred_region
      _
    $region41: #{attention_module_forward.1} parent=1 // pred_fallthru
      _
    // Predicated region
    $region42: #{attention_module_forward.1} parent=1 // pred_check
      _
    $region43: #{attention_module_forward.1} parent=1 // pred_check_branch
      %42 = sbr.rel (0) target = $region45
    $region44: #{attention_module_forward.1} parent=1 // pred_region
      _
    $region45: #{attention_module_forward.1} parent=1 // pred_fallthru
      _
    // Predicated region
    $region46: #{attention_module_forward.1} parent=1 // pred_check
      _
    $region47: #{attention_module_forward.1} parent=1 // pred_check_branch
      %44 = sbr.rel (0) target = $region49
    $region48: #{attention_module_forward.1} parent=1 // pred_region
      _
    $region49: #{attention_module_forward.1} parent=1 // pred_fallthru
      _
    // Predicated region
    $region50: #{attention_module_forward.1} parent=1 // pred_check
      _
    $region51: #{attention_module_forward.1} parent=1 // pred_check_branch
      %46 = sbr.rel (0) target = $region53
    $region52: #{attention_module_forward.1} parent=1 // pred_region
      _
    $region53: #{attention_module_forward.1} parent=1 // pred_fallthru
      _
    // Predicated region
    $region54: #{attention_module_forward.1} parent=1 // pred_check
      _
    $region55: #{attention_module_forward.1} parent=1 // pred_check_branch
      %48 = sbr.rel (0) target = $region57
    $region56: #{attention_module_forward.1} parent=1 // pred_region
      _
    $region57: #{attention_module_forward.1} parent=1 // pred_fallthru
      _
    // Predicated region
    $region58: #{attention_module_forward.1} parent=1 // pred_check
      _
    $region59: #{attention_module_forward.1} parent=1 // pred_check_branch
      %50 = sbr.rel (0) target = $region61
    $region60: #{attention_module_forward.1} parent=1 // pred_region
      _
    $region61: #{attention_module_forward.1} parent=1 // pred_fallthru
      _
    %v52 = vld [vmem:[%s2] sm:$0xff]
    %v53 = vld [vmem:[%s2 + $0x8] sm:$0xff]
    %v54 = vld [vmem:[%s2 + $0x10] sm:$0xff]
    %v55 = vld [vmem:[%s2 + $0x18] sm:$0xff]
    %v56 = vld [vmem:[%s2 + $0x20] sm:$0xff]
    %v57 = vld [vmem:[%s2 + $0x28] sm:$0xff]
    %v58 = vld [vmem:[%s2 + $0x30] sm:$0xff]
    %v59 = vld [vmem:[%s2 + $0x38] sm:$0xff]
    %v60 = vld [vmem:[%s3] sm:$0xff]
    %v61 = vld [vmem:[%s3 + $0x8] sm:$0xff]
    %v62 = vld [vmem:[%s3 + $0x10] sm:$0xff]
    %v63 = vld [vmem:[%s3 + $0x18] sm:$0xff]
    %v64 = vld [vmem:[%s3 + $0x20] sm:$0xff]
    %v65 = vld [vmem:[%s3 + $0x28] sm:$0xff]
    %v66 = vld [vmem:[%s3 + $0x30] sm:$0xff]
    %v67 = vld [vmem:[%s3 + $0x38] sm:$0xff]
    %v68 = vld [vmem:[%s0] sm:$0xff]
    %v69 = vld [vmem:[%s0 + $0x8] sm:$0xff]
    %v70 = vld [vmem:[%s1] sm:$0xff]
    %v71 = vld [vmem:[%s1 + $0x8] sm:$0xff]
    %v72 = vadd.f32 %v68, %v70
    %v73 = vadd.f32 %v69, %v71
    loop: start=0, step=1, limit=6
    $region62: #{attention_module_forward.1} parent=1 // loop_pre_header
      _
    $region63: #{attention_module_forward.1} parent=1 // loop_header
      %s75 = sphi 0, %s79
      %p76 = scmp.ge.s32.totalorder %s75, 6
      %v80 = vphi %v72, %v972
      %v81 = vphi %v73, %v973
    $region64: #{attention_module_forward.1} parent=1 // loop_header_branch
      %78 = sbr.rel (%p76) target = $region68
    $region65: #{attention_module_forward.1} parent=1 // loop_body
      %v82 = vpack.c.bf16 %v81, %v80
      %s83 = smul.u32 %s75, 4
      %s84 = smul.addr %s83, 4
      %s85 = scalar_lea.vmem %s4, %s84
      %v86 = vld [vmem:[%s85] sm:$0xf]
      %v87 = vld [vmem:[%s85 + $0x4] sm:$0xf]
      %v88 = vld [vmem:[%s85 + $0x8] sm:$0xf]
      %v89 = vld [vmem:[%s85 + $0xc] sm:$0xf]
      %v94 = vunpack.c.l.b16 %v86
      %v95 = vunpack.c.l.b16 %v87
      %v96 = vunpack.c.l.b16 %v88
      %v97 = vunpack.c.l.b16 %v89
      %v98 = vpack.c.b16 %v95, %v94
      %v99 = vpack.c.b16 %v97, %v96
      %vm102 = vcmask 261120
      %v104 = vsel %vm102, %v82, 0
      %106 = vmatprep.subr.bf16.mxu0 0
      %107 = vmatpush1.bf16.msra.mxu0 0
      %108 = vmatprep.subr.bf16.mxu0 0
      %109 = vmatpush1.bf16.msra.mxu0 0
      %110 = vmatprep.subr.bf16.mxu0 0
      %111 = vmatpush1.bf16.msra.mxu0 0
      %112 = vmatprep.subr.bf16.mxu0 0
      %113 = vmatpush1.bf16.msra.mxu0 0
      %114 = vmatprep.subr.bf16.mxu0 0
      %115 = vmatpush1.bf16.msra.mxu0 0
      %116 = vmatprep.subr.bf16.mxu0 0
      %117 = vmatpush1.bf16.msra.mxu0 0
      %118 = vmatprep.subr.bf16.mxu0 0
      %119 = vmatpush1.bf16.msra.mxu0 %v99
      %120 = vmatprep.subr.bf16.mxu0 0
      %121 = vmatpush1.bf16.msra.mxu0 %v98
      %122 = vmatprep.subr.bf16.mxu0 0
      %123 = vmatpush2.bf16.msra.mxu0 0
      %124 = vmatprep.subr.bf16.mxu0 0
      %125 = vmatpush2.bf16.msra.mxu0 0
      %126 = vmatprep.subr.bf16.mxu0 0
      %127 = vmatpush2.bf16.msra.mxu0 0
      %128 = vmatprep.subr.bf16.mxu0 0
      %129 = vmatpush2.bf16.msra.mxu0 0
      %130 = vmatprep.subr.bf16.mxu0 0
      %131 = vmatpush2.bf16.msra.mxu0 0
      %132 = vmatprep.subr.bf16.mxu0 0
      %133 = vmatpush2.bf16.msra.mxu0 0
      %134 = vmatprep.subr.bf16.mxu0 0
      %135 = vmatpush2.bf16.msra.mxu0 0
      %136 = vmatprep.subr.bf16.mxu0 0
      %137 = vmatpush2.bf16.msra.mxu0 0
      %138 = vmatprep.mubr.bf16.mxu0 0
      %139 = vmatmul.mubr.bf16.gmra.mxu0 %v104
      %v140 = vpop.f32.mrf.mxu0
      %v141 = vadd.f32 0.0, %v140
      %v142 = vpop.f32.mrf.mxu0
      %v143 = vpop.f32.mrf.mxu0
      %v144 = vadd.f32 0.0, %v143
      %v145 = vpop.f32.mrf.mxu0
      %146 = vdwg.mxu0
      %155 = vrot.lane.b32.xlu0 %v52, 32
      %v156 = vpop.permute.xlu0 %155
      %157 = vrot.lane.b32.xlu0 %v53, 32
      %v158 = vpop.permute.xlu0 %157
      %159 = vrot.lane.b32.xlu0 %v54, 32
      %v160 = vpop.permute.xlu0 %159
      %161 = vrot.lane.b32.xlu0 %v55, 32
      %v162 = vpop.permute.xlu0 %161
      %163 = vrot.lane.b32.xlu0 %v56, 32
      %v164 = vpop.permute.xlu0 %163
      %165 = vrot.lane.b32.xlu0 %v57, 32
      %v166 = vpop.permute.xlu0 %165
      %167 = vrot.lane.b32.xlu0 %v58, 32
      %v168 = vpop.permute.xlu0 %167
      %169 = vrot.lane.b32.xlu0 %v59, 32
      %v170 = vpop.permute.xlu0 %169
      %v179 = vmul.f32 %v141, %v156
      %v180 = vmul.f32 %v141, %v158
      %v181 = vmul.f32 %v141, %v160
      %v182 = vmul.f32 %v141, %v162
      %v183 = vmul.f32 %v141, %v164
      %v184 = vmul.f32 %v141, %v166
      %v185 = vmul.f32 %v141, %v168
      %v186 = vmul.f32 %v141, %v170
      %v187 = vmul.f32 %v144, %v156
      %v188 = vmul.f32 %v144, %v158
      %v189 = vmul.f32 %v144, %v160
      %v190 = vmul.f32 %v144, %v162
      %v191 = vmul.f32 %v144, %v164
      %v192 = vmul.f32 %v144, %v166
      %v193 = vmul.f32 %v144, %v168
      %v194 = vmul.f32 %v144, %v170
      %v195 = vpack.c.bf16 %v180, %v179
      %v196 = vpack.c.bf16 %v182, %v181
      %v197 = vpack.c.bf16 %v184, %v183
      %v198 = vpack.c.bf16 %v186, %v185
      %v199 = vpack.c.bf16 %v188, %v187
      %v200 = vpack.c.bf16 %v190, %v189
      %v201 = vpack.c.bf16 %v192, %v191
      %v202 = vpack.c.bf16 %v194, %v193
      %203 = vrot.lane.b32.xlu0 %v52, 64
      %v204 = vpop.permute.xlu0 %203
      %205 = vrot.lane.b32.xlu0 %v53, 64
      %v206 = vpop.permute.xlu0 %205
      %207 = vrot.lane.b32.xlu0 %v54, 64
      %v208 = vpop.permute.xlu0 %207
      %209 = vrot.lane.b32.xlu0 %v55, 64
      %v210 = vpop.permute.xlu0 %209
      %211 = vrot.lane.b32.xlu0 %v56, 64
      %v212 = vpop.permute.xlu0 %211
      %213 = vrot.lane.b32.xlu0 %v57, 64
      %v214 = vpop.permute.xlu0 %213
      %215 = vrot.lane.b32.xlu0 %v58, 64
      %v216 = vpop.permute.xlu0 %215
      %217 = vrot.lane.b32.xlu0 %v59, 64
      %v218 = vpop.permute.xlu0 %217
      %v227 = vmul.f32 %v141, %v204
      %v228 = vmul.f32 %v141, %v206
      %v229 = vmul.f32 %v141, %v208
      %v230 = vmul.f32 %v141, %v210
      %v231 = vmul.f32 %v141, %v212
      %v232 = vmul.f32 %v141, %v214
      %v233 = vmul.f32 %v141, %v216
      %v234 = vmul.f32 %v141, %v218
      %v235 = vmul.f32 %v144, %v204
      %v236 = vmul.f32 %v144, %v206
      %v237 = vmul.f32 %v144, %v208
      %v238 = vmul.f32 %v144, %v210
      %v239 = vmul.f32 %v144, %v212
      %v240 = vmul.f32 %v144, %v214
      %v241 = vmul.f32 %v144, %v216
      %v242 = vmul.f32 %v144, %v218
      %v243 = vpack.c.bf16 %v228, %v227
      %v244 = vpack.c.bf16 %v230, %v229
      %v245 = vpack.c.bf16 %v232, %v231
      %v246 = vpack.c.bf16 %v234, %v233
      %v247 = vpack.c.bf16 %v236, %v235
      %v248 = vpack.c.bf16 %v238, %v237
      %v249 = vpack.c.bf16 %v240, %v239
      %v250 = vpack.c.bf16 %v242, %v241
      %v251 = vpack.c.bf16 %v141, %v141
      %v252 = vpack.c.bf16 %v144, %v144
      %257 = vrot.lane.b32.xlu0 %v195, 96
      %v258 = vpop.permute.xlu0 %257
      %259 = vrot.lane.b32.xlu0 %v196, 96
      %v260 = vpop.permute.xlu0 %259
      %261 = vrot.lane.b32.xlu0 %v197, 96
      %v262 = vpop.permute.xlu0 %261
      %263 = vrot.lane.b32.xlu0 %v198, 96
      %v264 = vpop.permute.xlu0 %263
      %v266 = vsel %vm102, %v251, 0
      %v269 = vsel %vm102, %v258, 0
      %v272 = vsel %vm102, %v260, 0
      %v275 = vsel %vm102, %v262, 0
      %v278 = vsel %vm102, %v264, 0
      %280 = vmatprep.subr.bf16.mxu0 0
      %281 = vmatpush1.bf16.xpose.msra.mxu0 0
      %282 = vmatprep.subr.bf16.mxu0 0
      %283 = vmatpush1.bf16.xpose.msra.mxu0 0
      %284 = vmatprep.subr.bf16.mxu0 0
      %285 = vmatpush1.bf16.xpose.msra.mxu0 0
      %286 = vmatprep.subr.bf16.mxu0 0
      %287 = vmatpush1.bf16.xpose.msra.mxu0 0
      %288 = vmatprep.subr.bf16.mxu0 0
      %289 = vmatpush1.bf16.xpose.msra.mxu0 %v278
      %290 = vmatprep.subr.bf16.mxu0 0
      %291 = vmatpush1.bf16.xpose.msra.mxu0 %v275
      %292 = vmatprep.subr.bf16.mxu0 0
      %293 = vmatpush1.bf16.xpose.msra.mxu0 %v272
      %294 = vmatprep.subr.bf16.mxu0 0
      %295 = vmatpush1.bf16.xpose.msra.mxu0 %v269
      %296 = vmatprep.subr.bf16.mxu0 0
      %297 = vmatpush2.bf16.xpose.msra.mxu0 0
      %298 = vmatprep.subr.bf16.mxu0 0
      %299 = vmatpush2.bf16.xpose.msra.mxu0 0
      %300 = vmatprep.subr.bf16.mxu0 0
      %301 = vmatpush2.bf16.xpose.msra.mxu0 0
      %302 = vmatprep.subr.bf16.mxu0 0
      %303 = vmatpush2.bf16.xpose.msra.mxu0 0
      %304 = vmatprep.subr.bf16.mxu0 0
      %305 = vmatpush2.bf16.xpose.msra.mxu0 0
      %306 = vmatprep.subr.bf16.mxu0 0
      %307 = vmatpush2.bf16.xpose.msra.mxu0 0
      %308 = vmatprep.subr.bf16.mxu0 0
      %309 = vmatpush2.bf16.xpose.msra.mxu0 0
      %310 = vmatprep.subr.bf16.mxu0 0
      %311 = vmatpush2.bf16.xpose.msra.mxu0 0
      %312 = vmatprep.mubr.bf16.mxu0 0
      %313 = vmatmul.mubr.bf16.gmra.mxu0 %v266
      %v314 = vpop.f32.mrf.mxu0
      %v315 = vadd.f32 0.0, %v314
      %v316 = vpop.f32.mrf.mxu0
      %v317 = vpop.f32.mrf.mxu0
      %v318 = vpop.f32.mrf.mxu0
      %319 = vdwg.mxu0
      %324 = vrot.lane.b32.xlu0 %v199, 96
      %v325 = vpop.permute.xlu0 %324
      %326 = vrot.lane.b32.xlu0 %v200, 96
      %v327 = vpop.permute.xlu0 %326
      %328 = vrot.lane.b32.xlu0 %v201, 96
      %v329 = vpop.permute.xlu0 %328
      %330 = vrot.lane.b32.xlu0 %v202, 96
      %v331 = vpop.permute.xlu0 %330
      %v333 = vsel %vm102, %v252, 0
      %v336 = vsel %vm102, %v325, 0
      %v339 = vsel %vm102, %v327, 0
      %v342 = vsel %vm102, %v329, 0
      %v345 = vsel %vm102, %v331, 0
      %347 = vmatprep.subr.bf16.mxu0 0
      %348 = vmatpush1.bf16.xpose.msra.mxu0 0
      %349 = vmatprep.subr.bf16.mxu0 0
      %350 = vmatpush1.bf16.xpose.msra.mxu0 0
      %351 = vmatprep.subr.bf16.mxu0 0
      %352 = vmatpush1.bf16.xpose.msra.mxu0 0
      %353 = vmatprep.subr.bf16.mxu0 0
      %354 = vmatpush1.bf16.xpose.msra.mxu0 0
      %355 = vmatprep.subr.bf16.mxu0 0
      %356 = vmatpush1.bf16.xpose.msra.mxu0 %v345
      %357 = vmatprep.subr.bf16.mxu0 0
      %358 = vmatpush1.bf16.xpose.msra.mxu0 %v342
      %359 = vmatprep.subr.bf16.mxu0 0
      %360 = vmatpush1.bf16.xpose.msra.mxu0 %v339
      %361 = vmatprep.subr.bf16.mxu0 0
      %362 = vmatpush1.bf16.xpose.msra.mxu0 %v336
      %363 = vmatprep.subr.bf16.mxu0 0
      %364 = vmatpush2.bf16.xpose.msra.mxu0 0
      %365 = vmatprep.subr.bf16.mxu0 0
      %366 = vmatpush2.bf16.xpose.msra.mxu0 0
      %367 = vmatprep.subr.bf16.mxu0 0
      %368 = vmatpush2.bf16.xpose.msra.mxu0 0
      %369 = vmatprep.subr.bf16.mxu0 0
      %370 = vmatpush2.bf16.xpose.msra.mxu0 0
      %371 = vmatprep.subr.bf16.mxu0 0
      %372 = vmatpush2.bf16.xpose.msra.mxu0 0
      %373 = vmatprep.subr.bf16.mxu0 0
      %374 = vmatpush2.bf16.xpose.msra.mxu0 0
      %375 = vmatprep.subr.bf16.mxu0 0
      %376 = vmatpush2.bf16.xpose.msra.mxu0 0
      %377 = vmatprep.subr.bf16.mxu0 0
      %378 = vmatpush2.bf16.xpose.msra.mxu0 0
      %379 = vmatprep.mubr.bf16.mxu0 0
      %380 = vmatmul.mubr.bf16.gmra.mxu0 %v333
      %v381 = vpop.f32.mrf.mxu0
      %v382 = vadd.f32 0.0, %v381
      %v383 = vpop.f32.mrf.mxu0
      %v384 = vpop.f32.mrf.mxu0
      %v385 = vpop.f32.mrf.mxu0
      %386 = vdwg.mxu0
      %vm387 = vcmask 523264
      %v388 = vsel %vm387, %v315, -inf
      %389 = vmax.xlane.f32.xlu0 %v388
      %v390 = vpop.xlane.xlu0 %389
      %v391 = vsel %vm387, %v382, -inf
      %392 = vmax.xlane.f32.xlu0 %v391
      %v393 = vpop.xlane.xlu0 %392
      %v394 = vsub.f32 %v315, %v390
      %v395 = vsub.f32 %v382, %v393
      %v396 = vmul.f32 %v394, 1.442695
      %v397 = vpow.pop %v396
      %v398 = vmul.f32 %v395, 1.442695
      %v399 = vpow.pop %v398
      %v401 = vsel %vm387, %v397, 0
      %v404 = vsel %vm387, %v399, 0
      %406 = vmatprep.subr.mxu0 0.0
      %407 = vmatpush1.msra.mxu0 0.0
      %408 = vmatprep.subr.mxu0 0.0
      %409 = vmatpush1.msra.mxu0 0.0
      %410 = vmatprep.subr.mxu0 0.0
      %411 = vmatpush1.msra.mxu0 0.0
      %412 = vmatprep.subr.mxu0 0.0
      %413 = vmatpush1.msra.mxu0 0.0
      %414 = vmatprep.subr.mxu0 0.0
      %415 = vmatpush1.msra.mxu0 0.0
      %416 = vmatprep.subr.mxu0 0.0
      %417 = vmatpush1.msra.mxu0 0.0
      %418 = vmatprep.subr.mxu0 0.0
      %419 = vmatpush1.msra.mxu0 0.0
      %420 = vmatprep.subr.mxu0 0.0
      %421 = vmatpush1.msra.mxu0 0.0
      %422 = vmatprep.subr.mxu0 0.0
      %423 = vmatpush1.msra.mxu0 %v67
      %424 = vmatprep.subr.mxu0 0.0
      %425 = vmatpush1.msra.mxu0 %v66
      %426 = vmatprep.subr.mxu0 0.0
      %427 = vmatpush1.msra.mxu0 %v65
      %428 = vmatprep.subr.mxu0 0.0
      %429 = vmatpush1.msra.mxu0 %v64
      %430 = vmatprep.subr.mxu0 0.0
      %431 = vmatpush1.msra.mxu0 %v63
      %432 = vmatprep.subr.mxu0 0.0
      %433 = vmatpush1.msra.mxu0 %v62
      %434 = vmatprep.subr.mxu0 0.0
      %435 = vmatpush1.msra.mxu0 %v61
      %436 = vmatprep.subr.mxu0 0.0
      %437 = vmatpush1.msra.mxu0 %v60
      %438 = vmatprep.subr.mxu0 0.0
      %439 = vmatpush2.msra.mxu0 0.0
      %440 = vmatprep.subr.mxu0 0.0
      %441 = vmatpush2.msra.mxu0 0.0
      %442 = vmatprep.subr.mxu0 0.0
      %443 = vmatpush2.msra.mxu0 0.0
      %444 = vmatprep.subr.mxu0 0.0
      %445 = vmatpush2.msra.mxu0 0.0
      %446 = vmatprep.subr.mxu0 0.0
      %447 = vmatpush2.msra.mxu0 0.0
      %448 = vmatprep.subr.mxu0 0.0
      %449 = vmatpush2.msra.mxu0 0.0
      %450 = vmatprep.subr.mxu0 0.0
      %451 = vmatpush2.msra.mxu0 0.0
      %452 = vmatprep.subr.mxu0 0.0
      %453 = vmatpush2.msra.mxu0 0.0
      %454 = vmatprep.subr.mxu0 0.0
      %455 = vmatpush2.msra.mxu0 0.0
      %456 = vmatprep.subr.mxu0 0.0
      %457 = vmatpush2.msra.mxu0 0.0
      %458 = vmatprep.subr.mxu0 0.0
      %459 = vmatpush2.msra.mxu0 0.0
      %460 = vmatprep.subr.mxu0 0.0
      %461 = vmatpush2.msra.mxu0 0.0
      %462 = vmatprep.subr.mxu0 0.0
      %463 = vmatpush2.msra.mxu0 0.0
      %464 = vmatprep.subr.mxu0 0.0
      %465 = vmatpush2.msra.mxu0 0.0
      %466 = vmatprep.subr.mxu0 0.0
      %467 = vmatpush2.msra.mxu0 0.0
      %468 = vmatprep.subr.mxu0 0.0
      %469 = vmatpush2.msra.mxu0 0.0
      %470 = vmatprep.mubr.f32.mxu0 0.0
      %471 = vmatmul.mubr.f32.gmra.mxu0 %v401
      %v472 = vpop.f32.mrf.mxu0
      %v473 = vadd.f32 0.0, %v472
      %v474 = vpop.f32.mrf.mxu0
      %475 = vmatprep.mubr.f32.mxu0 0.0
      %476 = vmatmul.mubr.f32.gmra.mxu0 %v404
      %v477 = vpop.f32.mrf.mxu0
      %v478 = vadd.f32 0.0, %v477
      %v479 = vpop.f32.mrf.mxu0
      %480 = vdwg.mxu0
      %v481 = vrcp.pop %v473
      %v482 = vrcp.pop %v478
      %v483 = vmul.f32 %v397, %v481
      %v484 = vmul.f32 %v399, %v482
      %v485 = vpack.c.bf16 %v483, %v483
      %v486 = vpack.c.bf16 %v484, %v484
      %491 = vrot.lane.b32.xlu0 %v243, 64
      %v492 = vpop.permute.xlu0 %491
      %493 = vrot.lane.b32.xlu0 %v244, 64
      %v494 = vpop.permute.xlu0 %493
      %495 = vrot.lane.b32.xlu0 %v245, 64
      %v496 = vpop.permute.xlu0 %495
      %497 = vrot.lane.b32.xlu0 %v246, 64
      %v498 = vpop.permute.xlu0 %497
      %v504 = vsel %vm387, %v485, 0
      %506 = vmatprep.subr.bf16.mxu0 0
      %507 = vmatpush1.bf16.msra.mxu0 0
      %508 = vmatprep.subr.bf16.mxu0 0
      %509 = vmatpush1.bf16.msra.mxu0 0
      %510 = vmatprep.subr.bf16.mxu0 0
      %511 = vmatpush1.bf16.msra.mxu0 0
      %512 = vmatprep.subr.bf16.mxu0 0
      %513 = vmatpush1.bf16.msra.mxu0 0
      %514 = vmatprep.subr.bf16.mxu0 0
      %515 = vmatpush1.bf16.msra.mxu0 %v498
      %516 = vmatprep.subr.bf16.mxu0 0
      %517 = vmatpush1.bf16.msra.mxu0 %v496
      %518 = vmatprep.subr.bf16.mxu0 0
      %519 = vmatpush1.bf16.msra.mxu0 %v494
      %520 = vmatprep.subr.bf16.mxu0 0
      %521 = vmatpush1.bf16.msra.mxu0 %v492
      %522 = vmatprep.subr.bf16.mxu0 0
      %523 = vmatpush2.bf16.msra.mxu0 0
      %524 = vmatprep.subr.bf16.mxu0 0
      %525 = vmatpush2.bf16.msra.mxu0 0
      %526 = vmatprep.subr.bf16.mxu0 0
      %527 = vmatpush2.bf16.msra.mxu0 0
      %528 = vmatprep.subr.bf16.mxu0 0
      %529 = vmatpush2.bf16.msra.mxu0 0
      %530 = vmatprep.subr.bf16.mxu0 0
      %531 = vmatpush2.bf16.msra.mxu0 0
      %532 = vmatprep.subr.bf16.mxu0 0
      %533 = vmatpush2.bf16.msra.mxu0 0
      %534 = vmatprep.subr.bf16.mxu0 0
      %535 = vmatpush2.bf16.msra.mxu0 0
      %536 = vmatprep.subr.bf16.mxu0 0
      %537 = vmatpush2.bf16.msra.mxu0 0
      %538 = vmatprep.mubr.bf16.mxu0 0
      %539 = vmatmul.mubr.bf16.gmra.mxu0 %v504
      %v540 = vpop.f32.mrf.mxu0
      %v541 = vadd.f32 0.0, %v540
      %v542 = vpop.f32.mrf.mxu0
      %v543 = vpop.f32.mrf.mxu0
      %v544 = vpop.f32.mrf.mxu0
      %545 = vdwg.mxu0
      %550 = vrot.lane.b32.xlu0 %v247, 64
      %v551 = vpop.permute.xlu0 %550
      %552 = vrot.lane.b32.xlu0 %v248, 64
      %v553 = vpop.permute.xlu0 %552
      %554 = vrot.lane.b32.xlu0 %v249, 64
      %v555 = vpop.permute.xlu0 %554
      %556 = vrot.lane.b32.xlu0 %v250, 64
      %v557 = vpop.permute.xlu0 %556
      %v563 = vsel %vm387, %v486, 0
      %565 = vmatprep.subr.bf16.mxu0 0
      %566 = vmatpush1.bf16.msra.mxu0 0
      %567 = vmatprep.subr.bf16.mxu0 0
      %568 = vmatpush1.bf16.msra.mxu0 0
      %569 = vmatprep.subr.bf16.mxu0 0
      %570 = vmatpush1.bf16.msra.mxu0 0
      %571 = vmatprep.subr.bf16.mxu0 0
      %572 = vmatpush1.bf16.msra.mxu0 0
      %573 = vmatprep.subr.bf16.mxu0 0
      %574 = vmatpush1.bf16.msra.mxu0 %v557
      %575 = vmatprep.subr.bf16.mxu0 0
      %576 = vmatpush1.bf16.msra.mxu0 %v555
      %577 = vmatprep.subr.bf16.mxu0 0
      %578 = vmatpush1.bf16.msra.mxu0 %v553
      %579 = vmatprep.subr.bf16.mxu0 0
      %580 = vmatpush1.bf16.msra.mxu0 %v551
      %581 = vmatprep.subr.bf16.mxu0 0
      %582 = vmatpush2.bf16.msra.mxu0 0
      %583 = vmatprep.subr.bf16.mxu0 0
      %584 = vmatpush2.bf16.msra.mxu0 0
      %585 = vmatprep.subr.bf16.mxu0 0
      %586 = vmatpush2.bf16.msra.mxu0 0
      %587 = vmatprep.subr.bf16.mxu0 0
      %588 = vmatpush2.bf16.msra.mxu0 0
      %589 = vmatprep.subr.bf16.mxu0 0
      %590 = vmatpush2.bf16.msra.mxu0 0
      %591 = vmatprep.subr.bf16.mxu0 0
      %592 = vmatpush2.bf16.msra.mxu0 0
      %593 = vmatprep.subr.bf16.mxu0 0
      %594 = vmatpush2.bf16.msra.mxu0 0
      %595 = vmatprep.subr.bf16.mxu0 0
      %596 = vmatpush2.bf16.msra.mxu0 0
      %597 = vmatprep.mubr.bf16.mxu0 0
      %598 = vmatmul.mubr.bf16.gmra.mxu0 %v563
      %v599 = vpop.f32.mrf.mxu0
      %v600 = vadd.f32 0.0, %v599
      %v601 = vpop.f32.mrf.mxu0
      %v602 = vpop.f32.mrf.mxu0
      %v603 = vpop.f32.mrf.mxu0
      %604 = vdwg.mxu0
      %v605 = vpack.c.bf16 %v600, %v541
      %s606 = smul.addr %s83, 4
      %s607 = scalar_lea.vmem %s5, %s606
      %v608 = vld [vmem:[%s607] sm:$0xf]
      %v609 = vld [vmem:[%s607 + $0x4] sm:$0xf]
      %v610 = vld [vmem:[%s607 + $0x8] sm:$0xf]
      %v611 = vld [vmem:[%s607 + $0xc] sm:$0xf]
      %v616 = vunpack.c.l.b16 %v608
      %v617 = vunpack.c.l.b16 %v609
      %v618 = vunpack.c.l.b16 %v610
      %v619 = vunpack.c.l.b16 %v611
      %v620 = vpack.c.b16 %v617, %v616
      %v621 = vpack.c.b16 %v619, %v618
      %v625 = vsel %vm102, %v605, 0
      %627 = vmatprep.subr.bf16.mxu0 0
      %628 = vmatpush1.bf16.msra.mxu0 0
      %629 = vmatprep.subr.bf16.mxu0 0
      %630 = vmatpush1.bf16.msra.mxu0 0
      %631 = vmatprep.subr.bf16.mxu0 0
      %632 = vmatpush1.bf16.msra.mxu0 0
      %633 = vmatprep.subr.bf16.mxu0 0
      %634 = vmatpush1.bf16.msra.mxu0 0
      %635 = vmatprep.subr.bf16.mxu0 0
      %636 = vmatpush1.bf16.msra.mxu0 0
      %637 = vmatprep.subr.bf16.mxu0 0
      %638 = vmatpush1.bf16.msra.mxu0 0
      %639 = vmatprep.subr.bf16.mxu0 0
      %640 = vmatpush1.bf16.msra.mxu0 %v621
      %641 = vmatprep.subr.bf16.mxu0 0
      %642 = vmatpush1.bf16.msra.mxu0 %v620
      %643 = vmatprep.subr.bf16.mxu0 0
      %644 = vmatpush2.bf16.msra.mxu0 0
      %645 = vmatprep.subr.bf16.mxu0 0
      %646 = vmatpush2.bf16.msra.mxu0 0
      %647 = vmatprep.subr.bf16.mxu0 0
      %648 = vmatpush2.bf16.msra.mxu0 0
      %649 = vmatprep.subr.bf16.mxu0 0
      %650 = vmatpush2.bf16.msra.mxu0 0
      %651 = vmatprep.subr.bf16.mxu0 0
      %652 = vmatpush2.bf16.msra.mxu0 0
      %653 = vmatprep.subr.bf16.mxu0 0
      %654 = vmatpush2.bf16.msra.mxu0 0
      %655 = vmatprep.subr.bf16.mxu0 0
      %656 = vmatpush2.bf16.msra.mxu0 0
      %657 = vmatprep.subr.bf16.mxu0 0
      %658 = vmatpush2.bf16.msra.mxu0 0
      %659 = vmatprep.mubr.bf16.mxu0 0
      %660 = vmatmul.mubr.bf16.gmra.mxu0 %v625
      %v661 = vpop.f32.mrf.mxu0
      %v662 = vadd.f32 0.0, %v661
      %v663 = vpop.f32.mrf.mxu0
      %v664 = vpop.f32.mrf.mxu0
      %v665 = vadd.f32 0.0, %v664
      %v666 = vpop.f32.mrf.mxu0
      %667 = vdwg.mxu0
      %v668 = vadd.f32 %v80, %v662
      %v669 = vadd.f32 %v81, %v665
      %s670 = scalar_lea.vmem %s8, %s75
      %v671 = vld [vmem:[%s670] sm:$0x1]
      %v673 = vlaneseq
      %v674 = vshrl.u32 %v673, 7
      %v675 = vsub.s32 0, %v674
      %v676 = vrot.slane %v671, %v675
      %v678 = vadd.f32 %v668, %v676
      %v679 = vadd.f32 %v669, %v676
      %v680 = vsel %vm102, %v678, 0.0
      %v681 = vsel %vm102, %v679, 0.0
      %v682 = vadd.f32 %v680, %v681
      %v683 = vrot.slane %v682, 4
      %v684 = vadd.f32 %v682, %v683
      %v685 = vrot.slane %v684, 2
      %v686 = vadd.f32 %v684, %v685
      %v687 = vrot.slane %v686, 1
      %v688 = vadd.f32 %v686, %v687
      %v689 = vmul.f32 %v688, 0.0625
      %v690 = vmul.f32 %v678, %v678
      %v691 = vmul.f32 %v679, %v679
      %v692 = vsel %vm102, %v690, 0.0
      %v693 = vsel %vm102, %v691, 0.0
      %v694 = vadd.f32 %v692, %v693
      %v695 = vrot.slane %v694, 4
      %v696 = vadd.f32 %v694, %v695
      %v697 = vrot.slane %v696, 2
      %v698 = vadd.f32 %v696, %v697
      %v699 = vrot.slane %v698, 1
      %v700 = vadd.f32 %v698, %v699
      %v701 = vmul.f32 %v700, 0.0625
      %v702 = vsub.f32 %v678, %v689
      %v703 = vsub.f32 %v679, %v689
      %v704 = vmul.f32 %v689, %v689
      %v705 = vsub.f32 %v701, %v704
      %v706 = vadd.f32 %v705, 1e-05
      %v707 = vrsqrt.pop %v706
      %v708 = vmul.f32 %v702, %v707
      %v709 = vmul.f32 %v703, %v707
      %s710 = scalar_lea.vmem %s11, %s75
      %v711 = vld [vmem:[%s710] sm:$0x1]
      %v713 = vlaneseq
      %v714 = vshrl.u32 %v713, 7
      %v715 = vsub.s32 0, %v714
      %v716 = vrot.slane %v711, %v715
      %v718 = vmul.f32 %v708, %v716
      %v719 = vmul.f32 %v709, %v716
      %s720 = scalar_lea.vmem %s12, %s75
      %v721 = vld [vmem:[%s720] sm:$0x1]
      %v723 = vlaneseq
      %v724 = vshrl.u32 %v723, 7
      %v725 = vsub.s32 0, %v724
      %v726 = vrot.slane %v721, %v725
      %v728 = vadd.f32 %v718, %v726
      %v729 = vadd.f32 %v719, %v726
      %v730 = vpack.c.bf16 %v729, %v728
      %s731 = smul.addr %s83, 4
      %s732 = scalar_lea.vmem %s6, %s731
      %v733 = vld [vmem:[%s732] sm:$0xf]
      %v734 = vld [vmem:[%s732 + $0x4] sm:$0xf]
      %v735 = vld [vmem:[%s732 + $0x8] sm:$0xf]
      %v736 = vld [vmem:[%s732 + $0xc] sm:$0xf]
      %s737 = scalar_lea.vmem %s9, %s75
      %v738 = vld [vmem:[%s737] sm:$0x1]
      %v740 = vlaneseq
      %v741 = vshrl.u32 %v740, 7
      %v742 = vsub.s32 0, %v741
      %v743 = vrot.slane %v738, %v742
      %v749 = vunpack.c.l.b16 %v733
      %v750 = vunpack.c.l.b16 %v734
      %v751 = vunpack.c.l.b16 %v735
      %v752 = vunpack.c.l.b16 %v736
      %v753 = vpack.c.b16 %v750, %v749
      %v754 = vpack.c.b16 %v752, %v751
      %v758 = vsel %vm102, %v730, 0
      %760 = vmatprep.subr.bf16.mxu0 0
      %761 = vmatpush1.bf16.msra.mxu0 0
      %762 = vmatprep.subr.bf16.mxu0 0
      %763 = vmatpush1.bf16.msra.mxu0 0
      %764 = vmatprep.subr.bf16.mxu0 0
      %765 = vmatpush1.bf16.msra.mxu0 0
      %766 = vmatprep.subr.bf16.mxu0 0
      %767 = vmatpush1.bf16.msra.mxu0 0
      %768 = vmatprep.subr.bf16.mxu0 0
      %769 = vmatpush1.bf16.msra.mxu0 0
      %770 = vmatprep.subr.bf16.mxu0 0
      %771 = vmatpush1.bf16.msra.mxu0 0
      %772 = vmatprep.subr.bf16.mxu0 0
      %773 = vmatpush1.bf16.msra.mxu0 %v754
      %774 = vmatprep.subr.bf16.mxu0 0
      %775 = vmatpush1.bf16.msra.mxu0 %v753
      %776 = vmatprep.subr.bf16.mxu0 0
      %777 = vmatpush2.bf16.msra.mxu0 0
      %778 = vmatprep.subr.bf16.mxu0 0
      %779 = vmatpush2.bf16.msra.mxu0 0
      %780 = vmatprep.subr.bf16.mxu0 0
      %781 = vmatpush2.bf16.msra.mxu0 0
      %782 = vmatprep.subr.bf16.mxu0 0
      %783 = vmatpush2.bf16.msra.mxu0 0
      %784 = vmatprep.subr.bf16.mxu0 0
      %785 = vmatpush2.bf16.msra.mxu0 0
      %786 = vmatprep.subr.bf16.mxu0 0
      %787 = vmatpush2.bf16.msra.mxu0 0
      %788 = vmatprep.subr.bf16.mxu0 0
      %789 = vmatpush2.bf16.msra.mxu0 0
      %790 = vmatprep.subr.bf16.mxu0 0
      %791 = vmatpush2.bf16.msra.mxu0 0
      %792 = vmatprep.mubr.bf16.mxu0 0
      %793 = vmatmul.mubr.bf16.gmra.mxu0 %v758
      %v794 = vpop.f32.mrf.mxu0
      %v795 = vadd.f32 %v743, %v794
      %v796 = vpop.f32.mrf.mxu0
      %v797 = vpop.f32.mrf.mxu0
      %v798 = vadd.f32 %v743, %v797
      %v799 = vpop.f32.mrf.mxu0
      %800 = vdwg.mxu0
      %v801 = vmax.f32 %v795, 0.0
      %v802 = vmax.f32 %v798, 0.0
      %v803 = vpack.c.bf16 %v802, %v801
      %s804 = smul.u32 %s75, 16
      %s805 = smul.addr %s804, 4
      %s806 = scalar_lea.vmem %s7, %s805
      %v807 = vld [vmem:[%s806] sm:$0xf]
      %v808 = vld [vmem:[%s806 + $0x4] sm:$0xf]
      %v809 = vld [vmem:[%s806 + $0x8] sm:$0xf]
      %v810 = vld [vmem:[%s806 + $0xc] sm:$0xf]
      %v811 = vld [vmem:[%s806 + $0x10] sm:$0xf]
      %v812 = vld [vmem:[%s806 + $0x14] sm:$0xf]
      %v813 = vld [vmem:[%s806 + $0x18] sm:$0xf]
      %v814 = vld [vmem:[%s806 + $0x1c] sm:$0xf]
      %v815 = vld [vmem:[%s806 + $0x20] sm:$0xf]
      %v816 = vld [vmem:[%s806 + $0x24] sm:$0xf]
      %v817 = vld [vmem:[%s806 + $0x28] sm:$0xf]
      %v818 = vld [vmem:[%s806 + $0x2c] sm:$0xf]
      %v819 = vld [vmem:[%s806 + $0x30] sm:$0xf]
      %v820 = vld [vmem:[%s806 + $0x34] sm:$0xf]
      %v821 = vld [vmem:[%s806 + $0x38] sm:$0xf]
      %v822 = vld [vmem:[%s806 + $0x3c] sm:$0xf]
      %v839 = vunpack.c.l.b16 %v807
      %v840 = vunpack.c.l.b16 %v808
      %v841 = vunpack.c.l.b16 %v809
      %v842 = vunpack.c.l.b16 %v810
      %v843 = vunpack.c.l.b16 %v811
      %v844 = vunpack.c.l.b16 %v812
      %v845 = vunpack.c.l.b16 %v813
      %v846 = vunpack.c.l.b16 %v814
      %v847 = vunpack.c.l.b16 %v815
      %v848 = vunpack.c.l.b16 %v816
      %v849 = vunpack.c.l.b16 %v817
      %v850 = vunpack.c.l.b16 %v818
      %v851 = vunpack.c.l.b16 %v819
      %v852 = vunpack.c.l.b16 %v820
      %v853 = vunpack.c.l.b16 %v821
      %v854 = vunpack.c.l.b16 %v822
      %v855 = vpack.c.b16 %v840, %v839
      %v856 = vpack.c.b16 %v842, %v841
      %v857 = vpack.c.b16 %v844, %v843
      %v858 = vpack.c.b16 %v846, %v845
      %v859 = vpack.c.b16 %v848, %v847
      %v860 = vpack.c.b16 %v850, %v849
      %v861 = vpack.c.b16 %v852, %v851
      %v862 = vpack.c.b16 %v854, %v853
      %871 = vmatprep.subr.bf16.mxu0 0
      %872 = vmatpush1.bf16.msra.mxu0 %v862
      %873 = vmatprep.subr.bf16.mxu0 0
      %874 = vmatpush1.bf16.msra.mxu0 %v861
      %875 = vmatprep.subr.bf16.mxu0 0
      %876 = vmatpush1.bf16.msra.mxu0 %v860
      %877 = vmatprep.subr.bf16.mxu0 0
      %878 = vmatpush1.bf16.msra.mxu0 %v859
      %879 = vmatprep.subr.bf16.mxu0 0
      %880 = vmatpush1.bf16.msra.mxu0 %v858
      %881 = vmatprep.subr.bf16.mxu0 0
      %882 = vmatpush1.bf16.msra.mxu0 %v857
      %883 = vmatprep.subr.bf16.mxu0 0
      %884 = vmatpush1.bf16.msra.mxu0 %v856
      %885 = vmatprep.subr.bf16.mxu0 0
      %886 = vmatpush1.bf16.msra.mxu0 %v855
      %887 = vmatprep.subr.bf16.mxu0 0
      %888 = vmatpush2.bf16.msra.mxu0 0
      %889 = vmatprep.subr.bf16.mxu0 0
      %890 = vmatpush2.bf16.msra.mxu0 0
      %891 = vmatprep.subr.bf16.mxu0 0
      %892 = vmatpush2.bf16.msra.mxu0 0
      %893 = vmatprep.subr.bf16.mxu0 0
      %894 = vmatpush2.bf16.msra.mxu0 0
      %895 = vmatprep.subr.bf16.mxu0 0
      %896 = vmatpush2.bf16.msra.mxu0 0
      %897 = vmatprep.subr.bf16.mxu0 0
      %898 = vmatpush2.bf16.msra.mxu0 0
      %899 = vmatprep.subr.bf16.mxu0 0
      %900 = vmatpush2.bf16.msra.mxu0 0
      %901 = vmatprep.subr.bf16.mxu0 0
      %902 = vmatpush2.bf16.msra.mxu0 0
      %903 = vmatprep.mubr.bf16.mxu0 0
      %904 = vmatmul.mubr.bf16.gmra.mxu0 %v803
      %v905 = vpop.f32.mrf.mxu0
      %v906 = vadd.f32 0.0, %v905
      %v907 = vpop.f32.mrf.mxu0
      %v908 = vpop.f32.mrf.mxu0
      %v909 = vadd.f32 0.0, %v908
      %v910 = vpop.f32.mrf.mxu0
      %911 = vdwg.mxu0
      %v912 = vadd.f32 %v728, %v906
      %v913 = vadd.f32 %v729, %v909
      %s914 = scalar_lea.vmem %s10, %s75
      %v915 = vld [vmem:[%s914] sm:$0x1]
      %v917 = vlaneseq
      %v918 = vshrl.u32 %v917, 7
      %v919 = vsub.s32 0, %v918
      %v920 = vrot.slane %v915, %v919
      %v922 = vadd.f32 %v912, %v920
      %v923 = vadd.f32 %v913, %v920
      %v924 = vsel %vm102, %v922, 0.0
      %v925 = vsel %vm102, %v923, 0.0
      %v926 = vadd.f32 %v924, %v925
      %v927 = vrot.slane %v926, 4
      %v928 = vadd.f32 %v926, %v927
      %v929 = vrot.slane %v928, 2
      %v930 = vadd.f32 %v928, %v929
      %v931 = vrot.slane %v930, 1
      %v932 = vadd.f32 %v930, %v931
      %v933 = vmul.f32 %v932, 0.0625
      %v934 = vmul.f32 %v922, %v922
      %v935 = vmul.f32 %v923, %v923
      %v936 = vsel %vm102, %v934, 0.0
      %v937 = vsel %vm102, %v935, 0.0
      %v938 = vadd.f32 %v936, %v937
      %v939 = vrot.slane %v938, 4
      %v940 = vadd.f32 %v938, %v939
      %v941 = vrot.slane %v940, 2
      %v942 = vadd.f32 %v940, %v941
      %v943 = vrot.slane %v942, 1
      %v944 = vadd.f32 %v942, %v943
      %v945 = vmul.f32 %v944, 0.0625
      %v946 = vsub.f32 %v922, %v933
      %v947 = vsub.f32 %v923, %v933
      %v948 = vmul.f32 %v933, %v933
      %v949 = vsub.f32 %v945, %v948
      %v950 = vadd.f32 %v949, 1e-05
      %v951 = vrsqrt.pop %v950
      %v952 = vmul.f32 %v946, %v951
      %v953 = vmul.f32 %v947, %v951
      %s954 = scalar_lea.vmem %s13, %s75
      %v955 = vld [vmem:[%s954] sm:$0x1]
      %v957 = vlaneseq
      %v958 = vshrl.u32 %v957, 7
      %v959 = vsub.s32 0, %v958
      %v960 = vrot.slane %v955, %v959
      %v962 = vmul.f32 %v952, %v960
      %v963 = vmul.f32 %v953, %v960
      %s964 = scalar_lea.vmem %s14, %s75
      %v965 = vld [vmem:[%s964] sm:$0x1]
      %v967 = vlaneseq
      %v968 = vshrl.u32 %v967, 7
      %v969 = vsub.s32 0, %v968
      %v970 = vrot.slane %v965, %v969
      %v972 = vadd.f32 %v962, %v970
      %v973 = vadd.f32 %v963, %v970
    $region66: #{attention_module_forward.1} parent=1 // loop_footer
      %s79 = sadd.s32 1, %s75
    $region67: #{attention_module_forward.1} parent=1 // loop_footer_branch
      %74 = sbr.rel target = $region63
    $region68: #{attention_module_forward.1} parent=1 // loop_exit
      _
    %vm974 = vcmask 261120
    %975 = vst.msk [vmem:[#allocation2] sm:$0xff] %vm974, %v80
    %976 = vst.msk [vmem:[#allocation2 + $0x8] sm:$0xff] %vm974, %v81
    // Predicated region
    $region69: #{attention_module_forward.1} parent=1 // pred_check
      _
    $region70: #{attention_module_forward.1} parent=1 // pred_check_branch
      %978 = sbr.rel (0) target = $region72
    $region71: #{attention_module_forward.1} parent=1 // pred_region
      %s980 = ssub.s32 256, 256
      %981 = vsyncadd [#allocation3], %s980
      %s982 = sshll.u32 [#allocation2], 4
      %s983 = int_to_ptr.vmem [resolvable:$true] %s982
      %988 = dma.vmem_to_hbm [thread:$0]  %s983, 256, %s15, [#allocation3], 128, 128, 8
    $region72: #{attention_module_forward.1} parent=1 // pred_fallthru
      _
    // Predicated region
    $region73: #{attention_module_forward.1} parent=1 // pred_check
      _
    $region74: #{attention_module_forward.1} parent=1 // pred_check_branch
      %990 = sbr.rel (0) target = $region76
    $region75: #{attention_module_forward.1} parent=1 // pred_region
      %991 = dma.done [#allocation3], 256
    $region76: #{attention_module_forward.1} parent=1 // pred_fallthru
      _
    %992 = vsyncpa [#allocation3], 1

</llo_original>
